<compile_context>
chip_gen: v7x
topology: tpu7x:2x2x1
jax: 0.10.0
libtpu: 0.0.40
codegen_flags: <defaults>
</compile_context>

<pallas_src>
import functools
import math

import jax
import jax.numpy as jnp
from jax.experimental import pallas as pl
from jax.experimental.pallas import tpu as pltpu


_LANE = 128
_TARGET_BLOCK_BYTES = 4 * 1024 * 1024       # ~4 MiB per block
_VMEM_LIMIT_BYTES = 32 * 1024 * 1024        # safe on v5e/v6e/v7x


def _copy_kernel(x_ref, o_ref):
    # Pure identity copy of one (block_rows, C) tile.  The reshape that splits
    # the dimension is free metadata and happens outside the kernel.
    o_ref[...] = x_ref[...]


def _sublane_multiple(dtype) -> int:
    # Min sublane tile: 8 for 32-bit, 16 for 16-bit, 32 for 8-bit dtypes.
    bits = jnp.dtype(dtype).itemsize * 8
    return 8 * max(1, 32 // bits)


def _choose_2d_layout(total: int, itemsize: int, sub: int):
    """Pick a lane-dense (R, C) view of the flat array and a row-block size."""
    if total % _LANE != 0:
        # Odd total (tiny arrays in practice, e.g. the 1-D docstring example):
        # single whole-array block -- block dims equal full dims, always legal.
        return 1, total, 1

    # Candidate lane widths: power-of-two multiples of 128 that divide total,
    # capped so that even the minimum (sub-row) block stays <= target bytes.
    max_c = max(_LANE, _TARGET_BLOCK_BYTES // (sub * itemsize))
    cands = []
    c = _LANE
    while c <= max_c and total % c == 0:
        cands.append(c)
        c *= 2

    # Prefer widths whose row count is sublane-aligned (so rows can be tiled),
    # and among those prefer ones that still leave room for >= 2 grid steps.
    aligned = [cc for cc in cands if (total // cc) % sub == 0]
    multi = [cc for cc in aligned if (total // cc) >= 2 * sub]
    if multi:
        c = max(multi)
    elif aligned:
        c = max(aligned)
    else:
        c = max(cands)
    r = total // c

    if r % sub != 0:
        # Rare non-alignable row count: take the full row extent in one block.
        # TODO(synk): pathological huge-but-unaligned shapes would want a
        # cdiv grid with a partial edge block here.
        return r, c, r

    target_elems = max(1, _TARGET_BLOCK_BYTES // itemsize)
    target_rows = max(sub, target_elems // c)
    if r >= 2 * sub:
        # Keep >= 2 grid steps so v7x can shard the copy across both TCs.
        target_rows = min(target_rows, max(sub, ((r // 2) // sub) * sub))

    # Largest multiple of `sub` that divides r and is <= target_rows.
    q = r // sub
    best = 1
    i = 1
    while i * i <= q:
        if q % i == 0:
            for d in (i, q // i):
                if best < d and d * sub <= target_rows:
                    best = d
        i += 1
    return r, c, best * sub


@functools.partial(jax.jit, static_argnames=("dim", "size1", "size2"))
def expand_dim(x, dim: int, size1: int, size2: int):
    """Pallas equivalent of ExpandDim(dim, size1, size2).forward(x)."""
    shape = list(x.shape)
    ndim = len(shape)
    if dim < 0:
        dim += ndim
    assert 0 <= dim < ndim
    assert shape[dim] == size1 * size2, (
        f"dim {dim} of size {shape[dim]} cannot be split into ({size1},{size2})"
    )
    out_shape = shape[:dim] + [size1, size2] + shape[dim + 1:]

    total = math.prod(shape)
    if total == 0:
        return jnp.reshape(x, out_shape)

    itemsize = jnp.dtype(x.dtype).itemsize
    sub = _sublane_multiple(x.dtype)
    r, c, block_rows = _choose_2d_layout(total, itemsize, sub)

    # Free metadata reshape to the canonical lane-dense 2-D layout.
    x2 = x.reshape(r, c)
    grid = (r // block_rows,)

    y2 = pl.pallas_call(
        _copy_kernel,
        out_shape=jax.ShapeDtypeStruct((r, c), x.dtype),
        grid_spec=pltpu.PrefetchScalarGridSpec(
            num_scalar_prefetch=0,
            grid=grid,
            in_specs=[pl.BlockSpec((block_rows, c), lambda i: (i, 0))],
            out_specs=pl.BlockSpec((block_rows, c), lambda i: (i, 0)),
        ),
        compiler_params=pltpu.CompilerParams(
            dimension_semantics=("parallel",),
            vmem_limit_bytes=_VMEM_LIMIT_BYTES,
        ),
    )(x2)

    # Free metadata reshape to the split output shape.
    return y2.reshape(out_shape)


if __name__ == "__main__":
    key = jax.random.PRNGKey(0)

    # ExpandDim(dim=1, size1=4, size2=8) on x of shape (2, 32, 256) -> (2, 4, 8, 256)
    x = jax.random.normal(key, (2, 32, 256), dtype=jnp.float32)
    y = jax.block_until_ready(expand_dim(x, 1, 4, 8))
    ref = x.reshape(2, 4, 8, 256)
    assert y.shape == ref.shape, (y.shape, ref.shape)
    assert y.dtype == ref.dtype
    assert bool(jnp.array_equal(y, ref))

    # bf16 path (exercises the dtype-aware sublane multiple): split last dim.
    xb = jax.random.normal(jax.random.PRNGKey(1), (2, 32, 256), dtype=jnp.bfloat16)
    yb = jax.block_until_ready(expand_dim(xb, 2, 16, 16))
    assert bool(jnp.array_equal(yb, xb.reshape(2, 32, 16, 16)))

    # Tiny 1-D case from the module docstring: Expand(dim=0, size1=3, size2=1).
    xt = jnp.array([1, 2, 3], dtype=jnp.int32)
    yt = jax.block_until_ready(expand_dim(xt, 0, 3, 1))
    assert bool(jnp.array_equal(yt, xt.reshape(3, 1)))

    print("KERNEL_OK")
</pallas_src>

<mosaic_0001>
module attributes {stable_mosaic.version = 11 : i64} {
  func.func @_copy_kernel(%arg0: i32, %arg1: memref<8x1024xf32, #tpu.memory_space<vmem>>, %arg2: memref<8x1024xf32, #tpu.memory_space<vmem>>) attributes {dimension_semantics = [#tpu.dimension_semantics<parallel>], iteration_bounds = array<i64: 2>, scalar_prefetch = 0 : i64, scratch_operands = 0 : i64, tpu.core_type = #tpu.core_type<tc>, window_params = [{transform_indices = @transform_0, window_bounds = array<i64: 8, 1024>}, {transform_indices = @transform_1, window_bounds = array<i64: 8, 1024>}]} {
    %c0 = arith.constant 0 : index
    %c0_0 = arith.constant 0 : index
    %0 = vector.load %arg1[%c0, %c0_0] : memref<8x1024xf32, #tpu.memory_space<vmem>>, vector<8x1024xf32>
    %c0_1 = arith.constant 0 : index
    %c0_2 = arith.constant 0 : index
    %1 = vector.load %arg2[%c0_1, %c0_2] : memref<8x1024xf32, #tpu.memory_space<vmem>>, vector<8x1024xf32>
    tpu.vector_store %arg2[%c0_1, %c0_2], %0 {strides = array<i32>} : memref<8x1024xf32, #tpu.memory_space<vmem>>, vector<8x1024xf32>,
    return
  }
  func.func @transform_0(%arg0: i32) -> (i32, i32) {
    %c0_i32 = arith.constant 0 : i32
    %c0_i32_0 = arith.constant 0 : i32
    return %arg0, %c0_i32 : i32, i32
  }
  func.func @transform_1(%arg0: i32) -> (i32, i32) {
    %c0_i32 = arith.constant 0 : i32
    %c0_i32_0 = arith.constant 0 : i32
    return %arg0, %c0_i32 : i32, i32
  }
}

</mosaic_0001>

<llo_original>
// kernel: expand_dim.1
$region0: #{expand_dim.1}
  #allocation0 [shape = 'u32[]', space=smem, size = 0x4, offset = 0x4, fixed_abs, tag = 'smem constant byte address 0x4 - core index']
  #allocation1 [shape = 'u32[144,128]{1,0:T(1,128)}', space=vmem, size = 0x12000, scoped, tag = 'internal scratch']
  %s0 = inlined_call_operand.vmem [shape: f32[16,1024], index: 0, kind: input, shape index: {}]
  %s1 = inlined_call_operand.vmem [shape: f32[16,1024], index: 1, kind: output, shape index: {}]
  %s2 = sld [smem:[#allocation0]]
  $region37: #{expand_dim.1} parent=0
    _
  %s4 = ssub.s32 1, %s2
  %s5 = scalar_select 0, %s4, %s2
  loop: start=0, step=1, limit=4
  $region2: #{expand_dim.1} parent=0 // loop_pre_header
    _
  $region3: #{expand_dim.1} parent=0 // loop_header
    %s7 = sphi 0, %s11
    %p8 = scmp.ge.s32.totalorder %s7, 4
    %s17 = sphi 0, %s19
    %s20 = sphi 0, %s17
    %s21 = sphi 0, %s20
    %s37 = sphi 0, %s21
    %s43 = sphi 0, %s45
    %s46 = sphi 0, %s43
    %s47 = sphi 0, %s46
    %s63 = sphi 0, %s47
  $region4: #{expand_dim.1} parent=0 // loop_header_branch
    %10 = sbr.rel (%p8) target = $region8
  $region5: #{expand_dim.1} parent=0 // loop_body
    %s12 = ssub.s32 %s7, 1
    %s13 = ssub.s32 %s7, 2
    %s14 = sadd.s32 %s7, 1
    %s15 = ssub.s32 %s7, %s14
    %p16 = scmp.eq.s32.totalorder %s15, 0
    %s18 = sadd.s32 %s17, 1
    %s19 = scalar_select %p16, %s17, %s18
    %p22 = pneg %p16
    %p23 = scmp.eq.s32.totalorder %s7, 1
    %p24 = por %p22, %p23
    %p25 = scmp.ne.s32.totalorder %s17, %s20
    %p26 = scmp.eq.s32.totalorder %s7, 0
    %p27 = por %p25, %p26
    %p28 = scmp.ne.s32.totalorder %s17, %s20
    %p29 = scmp.eq.s32.totalorder %s12, 1
    %p30 = por %p28, %p29
    %p31 = scmp.ne.s32.totalorder %s20, %s21
    %p32 = scmp.eq.s32.totalorder %s12, 0
    %p33 = por %p31, %p32
    %p34 = scmp.ne.s32.totalorder %s20, %s21
    %p35 = scmp.eq.s32.totalorder %s13, 1
    %p36 = por %p34, %p35
    %p38 = scmp.ne.s32.totalorder %s21, %s37
    %p39 = scmp.eq.s32.totalorder %s13, 0
    %p40 = por %p38, %p39
    %s41 = ssub.s32 %s7, %s14
    %p42 = scmp.eq.s32.totalorder %s41, 0
    %s44 = sadd.s32 %s43, 1
    %s45 = scalar_select %p42, %s43, %s44
    %p48 = pneg %p42
    %p49 = scmp.eq.s32.totalorder %s7, 1
    %p50 = por %p48, %p49
    %p51 = scmp.ne.s32.totalorder %s43, %s46
    %p52 = scmp.eq.s32.totalorder %s7, 0
    %p53 = por %p51, %p52
    %p54 = scmp.ne.s32.totalorder %s43, %s46
    %p55 = scmp.eq.s32.totalorder %s12, 1
    %p56 = por %p54, %p55
    %p57 = scmp.ne.s32.totalorder %s46, %s47
    %p58 = scmp.eq.s32.totalorder %s12, 0
    %p59 = por %p57, %p58
    %p60 = scmp.ne.s32.totalorder %s46, %s47
    %p61 = scmp.eq.s32.totalorder %s13, 1
    %p62 = por %p60, %p61
    %p64 = scmp.ne.s32.totalorder %s47, %s63
    %p65 = scmp.eq.s32.totalorder %s13, 0
    %p66 = por %p64, %p65
    %p67 = scmp.le.s32.totalorder 1, %s7
    %p68 = scmp.lt.s32.totalorder %s7, 3
    %p69 = pnand %p67, %p68
    %p70 = pneg %p69
    // Predicated region
    $region9: #{expand_dim.1} parent=5 // pred_check
      _
    $region10: #{expand_dim.1} parent=5 // pred_check_branch
      %72 = sbr.rel (%p69) target = $region12
    $region11: #{expand_dim.1} parent=5 // pred_region
      %s73 = ssub.s32 %s7, 1
    $region12: #{expand_dim.1} parent=5 // pred_fallthru
      _
    %p74 = scmp.lt.s32.totalorder %s7, 2
    // Predicated region
    $region13: #{expand_dim.1} parent=5 // pred_check
      %p75 = pneg %p74
    $region14: #{expand_dim.1} parent=5 // pred_check_branch
      %77 = sbr.rel (%p75) target = $region16
    $region15: #{expand_dim.1} parent=5 // pred_region
      // Predicated region
      $region17: #{expand_dim.1} parent=15 // pred_check
        %p78 = pneg %p27
      $region18: #{expand_dim.1} parent=15 // pred_check_branch
        %80 = sbr.rel (%p78) target = $region20
      $region19: #{expand_dim.1} parent=15 // pred_region
        %p81 = scmp.lt.s32.totalorder %s7, 1
        %s82 = scalar_select %p81, %s7, 1
        %s83 = smul.addr %s82, 8
        %s84 = smul.addr %s83, 8
        %s85 = scalar_lea.vmem %s0, %s84
      $region20: #{expand_dim.1} parent=15 // pred_fallthru
        _
    $region16: #{expand_dim.1} parent=5 // pred_fallthru
      _
    %p86 = scmp.le.s32.totalorder 1, %s7
    %p87 = scmp.lt.s32.totalorder %s7, 3
    %p88 = pnand %p86, %p87
    %p89 = pneg %p88
    // Predicated region
    $region21: #{expand_dim.1} parent=5 // pred_check
      _
    $region22: #{expand_dim.1} parent=5 // pred_check_branch
      %91 = sbr.rel (%p88) target = $region24
    $region23: #{expand_dim.1} parent=5 // pred_region
      %s92 = ssub.s32 %s7, 1
      %p93 = scmp.lt.s32.totalorder %s12, 1
      %s94 = scalar_select %p93, %s12, 1
      %s95 = smul.addr %s94, 8
      %s96 = smul.addr %s95, 8
      %s97 = scalar_lea.vmem %s0, %s96
      %p98 = pneg %p33
      %p99 = pneg %p30
      %p100 = pneg %p59
      %p101 = pneg %p56
      %p102 = scmp.lt.s32.totalorder %s12, 1
      %s103 = scalar_select %p102, %s12, 1
      %s104 = smul.addr %s103, 8
      %s105 = smul.addr %s104, 8
      %s106 = scalar_lea.vmem %s1, %s105
      %p107 = scmp.lt.s32.totalorder %s12, 1
      %s108 = scalar_select %p107, %s12, 1
      %s109 = smul.addr %s108, 8
      %s110 = smul.addr %s109, 8
      %s111 = scalar_lea.vmem %s0, %s110
      %p112 = scmp.lt.s32.totalorder %s12, 1
      %s113 = scalar_select %p112, %s12, 1
      %s114 = smul.addr %s113, 8
      %s115 = smul.addr %s114, 8
      %s116 = scalar_lea.vmem %s1, %s115
      %v117 = vld [vmem:[%s111] sm:$0xff]
      %v118 = vld [vmem:[%s111 + $0x8] sm:$0xff]
      %v119 = vld [vmem:[%s111 + $0x10] sm:$0xff]
      %v120 = vld [vmem:[%s111 + $0x18] sm:$0xff]
      %v121 = vld [vmem:[%s111 + $0x20] sm:$0xff]
      %v122 = vld [vmem:[%s111 + $0x28] sm:$0xff]
      %v123 = vld [vmem:[%s111 + $0x30] sm:$0xff]
      %v124 = vld [vmem:[%s111 + $0x38] sm:$0xff]
      %125 = vst [vmem:[%s116] sm:$0xff] %v117
      %126 = vst [vmem:[%s116 + $0x8] sm:$0xff] %v118
      %127 = vst [vmem:[%s116 + $0x10] sm:$0xff] %v119
      %128 = vst [vmem:[%s116 + $0x18] sm:$0xff] %v120
      %129 = vst [vmem:[%s116 + $0x20] sm:$0xff] %v121
      %130 = vst [vmem:[%s116 + $0x28] sm:$0xff] %v122
      %131 = vst [vmem:[%s116 + $0x30] sm:$0xff] %v123
      %132 = vst [vmem:[%s116 + $0x38] sm:$0xff] %v124
      %p133 = scmp.lt.s32.totalorder %s12, 1
      %s134 = scalar_select %p133, %s12, 1
      %s135 = smul.addr %s134, 8
      %s136 = smul.addr %s135, 8
      %s137 = scalar_lea.vmem %s1, %s136
      // Predicated region
      $region25: #{expand_dim.1} parent=23 // pred_check
        %p138 = pneg %p56
      $region26: #{expand_dim.1} parent=23 // pred_check_branch
        %140 = sbr.rel (%p138) target = $region28
      $region27: #{expand_dim.1} parent=23 // pred_region
        _
      $region28: #{expand_dim.1} parent=23 // pred_fallthru
        _
    $region24: #{expand_dim.1} parent=5 // pred_fallthru
      _
    %p141 = scmp.le.s32.totalorder 2, %s7
    // Predicated region
    $region29: #{expand_dim.1} parent=5 // pred_check
      %p142 = pneg %p141
    $region30: #{expand_dim.1} parent=5 // pred_check_branch
      %144 = sbr.rel (%p142) target = $region32
    $region31: #{expand_dim.1} parent=5 // pred_region
      %s145 = ssub.s32 %s7, 2
      // Predicated region
      $region33: #{expand_dim.1} parent=31 // pred_check
        %p146 = pneg %p62
      $region34: #{expand_dim.1} parent=31 // pred_check_branch
        %148 = sbr.rel (%p146) target = $region36
      $region35: #{expand_dim.1} parent=31 // pred_region
        %p149 = scmp.lt.s32.totalorder %s13, 1
        %s150 = scalar_select %p149, %s13, 1
        %s151 = smul.addr %s150, 8
        %s152 = smul.addr %s151, 8
        %s153 = scalar_lea.vmem %s1, %s152
      $region36: #{expand_dim.1} parent=31 // pred_fallthru
        _
    $region32: #{expand_dim.1} parent=5 // pred_fallthru
      _
  $region6: #{expand_dim.1} parent=0 // loop_footer
    %s11 = sadd.s32 1, %s7
  $region7: #{expand_dim.1} parent=0 // loop_footer_branch
    %6 = sbr.rel target = $region3
  $region8: #{expand_dim.1} parent=0 // loop_exit
    _

</llo_original>
